<compile_context>
chip_gen: v6e
topology: v6e:2x2x1
jax: 0.10.0
libtpu: 0.0.40
codegen_flags: <defaults>
</compile_context>

<pallas_src>
import jax
import jax.numpy as jnp
from jax import lax
from jax.experimental import pallas as pl
from jax.experimental.pallas import tpu as pltpu

GN_EPS = 1e-5


def _row_gate_kernel(p_ref, x_ref, o_ref):
    """Per-row gate.

    p_ref : (2*halfpad, 3) f32 VMEM-resident table of per-channel [a, c, d]
            (constant block index -> DMA'd once, reused by every grid step).
    x_ref : (rows, hw) input tile (io dtype, possibly bf16).
    o_ref : (rows, hw) output tile (io dtype).
    """
    k = pl.program_id(1)
    jc = pl.program_id(2)
    rows = x_ref.shape[0]
    halfpad = p_ref.shape[0] // 2

    # Slice this block's rows out of the resident table.  start is always a
    # multiple of 8: halfpad % 8 == 0, and rows % 8 == 0 whenever nj > 1.
    start = pl.multiple_of(k * halfpad + jc * rows, 8)
    tab = p_ref[pl.ds(start, rows), :]                 # (rows, 3) f32
    a = tab[:, 0:1]
    c0 = tab[:, 1:2]
    d0 = tab[:, 2:3]

    # All math in f32 (bf16 only affects HBM bytes and the final store).
    x = x_ref[...].astype(jnp.float32)                 # (rows, hw)
    mean = jnp.mean(x, axis=-1, keepdims=True)
    xc = x - mean
    var = jnp.mean(xc * xc, axis=-1, keepdims=True)    # centered (stable) variance

    alpha = a * lax.rsqrt(var + GN_EPS)                # == 0 for channel-attn rows
    beta = c0 + d0 * mean - alpha * mean

    # NOTE: the k grid axis mixes channel-attention and GroupNorm rows inside
    # each block, so the variance pass cannot be skipped per grid step without
    # breaking correctness; the branchless (a, c, d) form handles both.
    o_ref[...] = (x * jax.nn.sigmoid(alpha * x + beta)).astype(o_ref.dtype)


def _round_up(x, m):
    return ((x + m - 1) // m) * m


def _default_block_bytes():
    """Per-block byte budget by TPU generation.  With double-buffered input +
    output blocks (4x budget) plus the small table this stays inside the
    default scoped VMEM limit on every generation."""
    try:
        kind = jax.devices()[0].device_kind.lower()
    except Exception:
        kind = ""
    if "v7" in kind:
        return 4 * 1024 * 1024    # 3.2 TB/s HBM: bigger steps amortize ~0.35us/step
    if "v6" in kind:
        return 3 * 1024 * 1024
    return 2 * 1024 * 1024        # v5e (16 MiB default scoped VMEM) / unknown


def _pick_rows_per_block(half, hw, itemsize, target_bytes):
    """Rows per grid step: a fixed multiple of 8 (no divisor-of-half
    requirement; the last block may be partial), capped by the byte budget."""
    if half < 8:
        return half               # block == full dim -> always legal
    # TODO(synk): for extremely large hw (an 8-row block alone approaching the
    # scoped VMEM limit) a spatial-tiled two-pass mean/var variant is needed.
    rows = (target_bytes // max(hw * itemsize, 1)) // 8 * 8
    rows = max(8, rows)
    rows = min(rows, (half // 8) * 8)
    return rows


def _gate_table(c, cg, half, halfpad, cweight, cbias, sweight, sbias, gamma,
                beta):
    """(2*halfpad, 3) f32 table of [a, c, d] per pre-shuffle channel (padded).

    Channel p, grouped index ch = p % (2*cg), param index m = ch % cg:
      ch <  cg (channel attn): a = 0,                  c = cbias[m],                    d = cweight[m]
      ch >= cg (GroupNorm)   : a = sweight[m]*gamma[m], c = sweight[m]*beta[m]+sbias[m], d = 0
    Table row k*halfpad + j  <->  pre-shuffle channel k*half + j.
    """
    p = jnp.arange(c)
    ch = p % (2 * cg)
    is_sp = ch >= cg
    m = jnp.where(is_sp, ch - cg, ch)
    a_col = jnp.where(is_sp, sweight[m] * gamma[m], 0.0)
    c_col = jnp.where(is_sp, sweight[m] * beta[m] + sbias[m], cbias[m])
    d_col = jnp.where(is_sp, 0.0, cweight[m])
    tab = jnp.stack([a_col, c_col, d_col], axis=1).astype(jnp.float32)  # (c, 3)
    tab = tab.reshape(2, half, 3)
    if halfpad > half:
        tab = jnp.pad(tab, ((0, 0), (0, halfpad - half), (0, 0)))
    return tab.reshape(2 * halfpad, 3)


def shuffle_attention(x, cweight, cbias, sweight, sbias, gamma, beta, *, G,
                      block_bytes=None):
    """ShuffleAttention forward.

    x : (b, c, h, w) in f32 or bf16 (bf16 halves HBM traffic; math stays f32).
    cweight/cbias/sweight/sbias/gamma/beta : (c // (2*G),) f32.
    """
    b, c, h, w = x.shape
    assert c % (2 * G) == 0, "channel must be divisible by 2*G"
    cg = c // (2 * G)
    hw = h * w
    half = c // 2
    io_dtype = x.dtype
    itemsize = jnp.dtype(io_dtype).itemsize

    if block_bytes is None:
        block_bytes = _default_block_bytes()
    jblk = _pick_rows_per_block(half, hw, itemsize, block_bytes)
    nj = pl.cdiv(half, jblk)
    halfpad = _round_up(nj * jblk, 8)

    table = _gate_table(c, cg, half, halfpad, cweight, cbias, sweight, sbias,
                        gamma, beta)
    x4 = x.reshape(b, 2, half, hw)      # pre-shuffle channel p = k*half + j

    cost = pl.CostEstimate(
        flops=8 * b * c * hw,
        transcendentals=b * c * hw,
        bytes_accessed=2 * b * c * hw * itemsize + table.size * 4)

    in_specs = [
        pl.BlockSpec((2 * halfpad, 3), lambda bb, k, jc: (0, 0)),   # resident
        pl.BlockSpec((None, None, jblk, hw), lambda bb, k, jc: (bb, k, jc, 0)),
    ]
    compiler_params = pltpu.CompilerParams(
        dimension_semantics=("parallel", "parallel", "parallel"))

    if hw % 128 == 0:
        # Fast path: lane-dense full-tile stores, channel_shuffle(groups=2)
        # folded into out_specs (output channel 2*j + k <- pre-shuffle channel
        # k*half + j) so the final (b, c, h, w) result is a plain reshape.
        out = pl.pallas_call(
            _row_gate_kernel,
            out_shape=jax.ShapeDtypeStruct((b, half, 2 * hw), io_dtype),
            grid_spec=pltpu.PrefetchScalarGridSpec(
                num_scalar_prefetch=0,
                grid=(b, 2, nj),
                in_specs=in_specs,
                out_specs=pl.BlockSpec((None, jblk, hw),
                                       lambda bb, k, jc: (bb, jc, k)),
            ),
            compiler_params=compiler_params,
            cost_estimate=cost,
        )(table, x4)
        return out.reshape(b, c, h, w)

    # Fallback (hw % 128 != 0): same channel-tiled kernel (VMEM-safe for any
    # c*hw); output is written pre-shuffle and the groups=2 shuffle is applied
    # by XLA afterwards.
    # TODO(synk): folding the shuffle here requires lane-padding hw to 128
    # (masked stats + a final slice); left as a post-kernel transpose.
    out = pl.pallas_call(
        _row_gate_kernel,
        out_shape=jax.ShapeDtypeStruct((b, 2, half, hw), io_dtype),
        grid_spec=pltpu.PrefetchScalarGridSpec(
            num_scalar_prefetch=0,
            grid=(b, 2, nj),
            in_specs=in_specs,
            out_specs=pl.BlockSpec((None, None, jblk, hw),
                                   lambda bb, k, jc: (bb, k, jc, 0)),
        ),
        compiler_params=compiler_params,
        cost_estimate=cost,
    )(table, x4)
    out = out.reshape(b, 2, half, h, w)
    out = jnp.transpose(out, (0, 2, 1, 3, 4))
    return out.reshape(b, c, h, w)


def shuffle_attention_ref(x, cweight, cbias, sweight, sbias, gamma, beta, *, G):
    """Pure-JAX reference mirroring the PyTorch forward (f32)."""
    b, c, h, w = x.shape
    cg = c // (2 * G)
    xg = x.reshape(b * G, 2 * cg, h, w)
    x0, x1 = xg[:, :cg], xg[:, cg:]

    cw = cweight.reshape(1, cg, 1, 1)
    cb = cbias.reshape(1, cg, 1, 1)
    sw = sweight.reshape(1, cg, 1, 1)
    sb = sbias.reshape(1, cg, 1, 1)
    g_ = gamma.reshape(1, cg, 1, 1)
    bt = beta.reshape(1, cg, 1, 1)

    pooled = jnp.mean(x0, axis=(2, 3), keepdims=True)
    x_channel = x0 * jax.nn.sigmoid(cw * pooled + cb)

    mean = jnp.mean(x1, axis=(2, 3), keepdims=True)
    var = jnp.mean((x1 - mean) ** 2, axis=(2, 3), keepdims=True)
    gn = (x1 - mean) / jnp.sqrt(var + GN_EPS) * g_ + bt
    x_spatial = x1 * jax.nn.sigmoid(sw * gn + sb)

    out = jnp.concatenate([x_channel, x_spatial], axis=1).reshape(b, c, h, w)
    out = out.reshape(b, 2, c // 2, h, w)
    out = jnp.transpose(out, (0, 2, 1, 3, 4))
    return out.reshape(b, c, h, w)


if __name__ == "__main__":
    def run_case(b, channel, h, w, G, dtype, atol, rtol, seed=0):
        cg = channel // (2 * G)
        key = jax.random.PRNGKey(seed)
        kx, k1, k2, k3, k4, k5, k6 = jax.random.split(key, 7)
        x = jax.random.normal(kx, (b, channel, h, w), dtype=jnp.float32)
        # Non-trivial parameters (module inits are 0/1 which would make the
        # gates constant); random values exercise both branches of the math.
        cweight = 0.5 * jax.random.normal(k1, (cg,), jnp.float32)
        cbias = 1.0 + 0.1 * jax.random.normal(k2, (cg,), jnp.float32)
        sweight = 0.5 * jax.random.normal(k3, (cg,), jnp.float32)
        sbias = 1.0 + 0.1 * jax.random.normal(k4, (cg,), jnp.float32)
        gamma = 1.0 + 0.1 * jax.random.normal(k5, (cg,), jnp.float32)
        beta = 0.1 * jax.random.normal(k6, (cg,), jnp.float32)

        xin = x.astype(dtype)
        out = shuffle_attention(xin, cweight, cbias, sweight, sbias, gamma,
                                beta, G=G)
        out = jax.block_until_ready(out)
        ref = shuffle_attention_ref(xin.astype(jnp.float32), cweight, cbias,
                                    sweight, sbias, gamma, beta, G=G)
        assert out.shape == (b, channel, h, w)
        assert jnp.allclose(out.astype(jnp.float32), ref, atol=atol,
                            rtol=rtol), (
            f"mismatch vs reference for shape={(b, channel, h, w)} "
            f"G={G} dtype={dtype}")

    # Fast path, exact block divisors (f32).
    run_case(2, 32, 16, 16, G=4, dtype=jnp.float32, atol=1e-5, rtol=1e-5)
    # Fast path with bf16 I/O (math stays f32 in-kernel).
    run_case(2, 32, 16, 16, G=4, dtype=jnp.bfloat16, atol=3e-2, rtol=3e-2)
    # Fast path with a partial (masked) last row-block (half=12 not /8).
    run_case(2, 24, 16, 16, G=2, dtype=jnp.float32, atol=1e-5, rtol=1e-5)
    # Fallback path (hw % 128 != 0), channel-tiled with partial blocks.
    run_case(2, 24, 10, 10, G=2, dtype=jnp.float32, atol=1e-5, rtol=1e-5)

    print("KERNEL_OK")
</pallas_src>

<mosaic_0001>
module attributes {stable_mosaic.version = 11 : i64} {
  func.func @_row_gate_kernel(%arg0: i32, %arg1: i32, %arg2: i32, %arg3: memref<32x3xf32, #tpu.memory_space<vmem>>, %arg4: memref<1x1x16x256xf32, #tpu.memory_space<vmem>>, %arg5: memref<1x16x256xf32, #tpu.memory_space<vmem>>) attributes {dimension_semantics = [#tpu.dimension_semantics<parallel>, #tpu.dimension_semantics<parallel>, #tpu.dimension_semantics<parallel>], iteration_bounds = array<i64: 2, 2, 1>, scalar_prefetch = 0 : i64, scratch_operands = 0 : i64, tpu.core_type = #tpu.core_type<tc>, window_params = [{pipeline_mode = #tpu.pipeline_mode<synchronous>, transform_indices = @transform_0, window_bounds = array<i64: 32, 3>}, {transform_indices = @transform_1, window_bounds = array<i64: 1, 1, 16, 256>}, {transform_indices = @transform_2, window_bounds = array<i64: 1, 16, 256>}]} {
    %c16_i32 = arith.constant 16 : i32
    %0 = arith.muli %arg1, %c16_i32 : i32
    %c16_i32_0 = arith.constant 16 : i32
    %1 = arith.muli %arg2, %c16_i32_0 : i32
    %2 = arith.addi %0, %1 : i32
    %3 = tpu.assume_multiple %2, 8 : i32
    %4 = arith.index_cast %3 : i32 to index
    %c0 = arith.constant 0 : index
    %5 = vector.load %arg3[%4, %c0] : memref<32x3xf32, #tpu.memory_space<vmem>>, vector<16x3xf32>
    %6 = vector.extract_strided_slice %5 {offsets = [0, 0], sizes = [16, 1], strides = [1, 1]} : vector<16x3xf32> to vector<16x1xf32>
    %7 = vector.extract_strided_slice %5 {offsets = [0, 1], sizes = [16, 1], strides = [1, 1]} : vector<16x3xf32> to vector<16x1xf32>
    %8 = vector.extract_strided_slice %5 {offsets = [0, 2], sizes = [16, 1], strides = [1, 1]} : vector<16x3xf32> to vector<16x1xf32>
    %c0_1 = arith.constant 0 : index
    %c0_2 = arith.constant 0 : index
    %c0_3 = arith.constant 0 : index
    %c0_4 = arith.constant 0 : index
    %9 = vector.load %arg4[%c0_1, %c0_2, %c0_3, %c0_4] : memref<1x1x16x256xf32, #tpu.memory_space<vmem>>, vector<1x1x16x256xf32>
    %10 = vector.shape_cast %9 : vector<1x1x16x256xf32> to vector<16x256xf32>
    %cst = arith.constant dense<0.000000e+00> : vector<16xf32>
    %11 = vector.multi_reduction <add>, %10, %cst [1] : vector<16x256xf32> to vector<16xf32>
    %12 = vector.shape_cast %11 : vector<16xf32> to vector<16x1xf32>
    %cst_5 = arith.constant 2.560000e+02 : f32
    %13 = vector.broadcast %cst_5 : f32 to vector<16x1xf32>
    %14 = arith.divf %12, %13 : vector<16x1xf32>
    %15 = vector.broadcast %14 : vector<16x1xf32> to vector<16x256xf32>
    %16 = arith.subf %10, %15 : vector<16x256xf32>
    %17 = arith.mulf %16, %16 : vector<16x256xf32>
    %cst_6 = arith.constant dense<0.000000e+00> : vector<16xf32>
    %18 = vector.multi_reduction <add>, %17, %cst_6 [1] : vector<16x256xf32> to vector<16xf32>
    %19 = vector.shape_cast %18 : vector<16xf32> to vector<16x1xf32>
    %cst_7 = arith.constant 2.560000e+02 : f32
    %20 = vector.broadcast %cst_7 : f32 to vector<16x1xf32>
    %21 = arith.divf %19, %20 : vector<16x1xf32>
    %cst_8 = arith.constant 9.99999974E-6 : f32
    %22 = vector.broadcast %cst_8 : f32 to vector<16x1xf32>
    %23 = arith.addf %21, %22 : vector<16x1xf32>
    %24 = math.rsqrt %23 : vector<16x1xf32>
    %25 = arith.mulf %6, %24 : vector<16x1xf32>
    %26 = arith.mulf %8, %14 : vector<16x1xf32>
    %27 = arith.addf %7, %26 : vector<16x1xf32>
    %28 = arith.mulf %25, %14 : vector<16x1xf32>
    %29 = arith.subf %27, %28 : vector<16x1xf32>
    %30 = vector.broadcast %25 : vector<16x1xf32> to vector<16x256xf32>
    %31 = arith.mulf %30, %10 : vector<16x256xf32>
    %32 = vector.broadcast %29 : vector<16x1xf32> to vector<16x256xf32>
    %33 = arith.addf %31, %32 : vector<16x256xf32>
    %34 = arith.negf %33 : vector<16x256xf32>
    %35 = math.exp %34 : vector<16x256xf32>
    %cst_9 = arith.constant 1.000000e+00 : f32
    %36 = vector.broadcast %cst_9 : f32 to vector<16x256xf32>
    %37 = arith.addf %36, %35 : vector<16x256xf32>
    %38 = arith.divf %36, %37 : vector<16x256xf32>
    %39 = arith.mulf %10, %38 : vector<16x256xf32>
    %c0_10 = arith.constant 0 : index
    %c0_11 = arith.constant 0 : index
    %c0_12 = arith.constant 0 : index
    %40 = vector.load %arg5[%c0_10, %c0_11, %c0_12] : memref<1x16x256xf32, #tpu.memory_space<vmem>>, vector<1x16x256xf32>
    %41 = vector.shape_cast %40 : vector<1x16x256xf32> to vector<16x256xf32>
    %42 = vector.shape_cast %39 : vector<16x256xf32> to vector<1x16x256xf32>
    tpu.vector_store %arg5[%c0_10, %c0_11, %c0_12], %42 {strides = array<i32>} : memref<1x16x256xf32, #tpu.memory_space<vmem>>, vector<1x16x256xf32>,
    return
  }
  func.func @transform_0(%arg0: i32, %arg1: i32, %arg2: i32) -> (i32, i32) {
    %c0_i32 = arith.constant 0 : i32
    %c0_i32_0 = arith.constant 0 : i32
    %c0_i32_1 = arith.constant 0 : i32
    return %c0_i32, %c0_i32_0 : i32, i32
  }
  func.func @transform_1(%arg0: i32, %arg1: i32, %arg2: i32) -> (i32, i32, i32, i32) {
    %c0_i32 = arith.constant 0 : i32
    %c0_i32_0 = arith.constant 0 : i32
    return %arg0, %arg1, %arg2, %c0_i32 : i32, i32, i32, i32
  }
  func.func @transform_2(%arg0: i32, %arg1: i32, %arg2: i32) -> (i32, i32, i32) {
    %c0_i32 = arith.constant 0 : i32
    return %arg0, %arg2, %arg1 : i32, i32, i32
  }
}

</mosaic_0001>

<llo_original>
// kernel: tpu_custom_call.1
$region0: #{tpu_custom_call.1}
  #allocation0 [shape = 'u32[]', space=smem, size = 0x4, offset = 0x4, fixed_abs, tag = 'smem constant byte address 0x4 - core index']
  #allocation1 [shape = 'u32[144,128]{1,0:T(1,128)}', space=vmem, size = 0x12000, scoped, tag = 'internal scratch']
  %s0 = inlined_call_operand.vmem [shape: f32[32,3], index: 0, kind: input, shape index: {}]
  %s1 = inlined_call_operand.hbm [shape: f32[2,2,16,256], index: 1, kind: input, shape index: {}]
  %s2 = inlined_call_operand.hbm [shape: f32[2,16,512], index: 2, kind: output, shape index: {}]
  %s3 = sld [smem:[#allocation0]]
  $region45: #{tpu_custom_call.1} parent=0
    _
  %s5 = ssub.s32 1, %s3
  %s6 = scalar_select 0, %s5, %s3
  $region1: #{tpu_custom_call.1} parent=0
    #allocation2 [shape = 'u8[32768]{0}', space=vmem, size = 0x8000, scoped, tag = 'input window, operand 1']
    #allocation3 [shape = 's32[2]{0}', space=sflag, size = 0x8, scoped, tag = 'scoped memory for tpu_custom_call.1']
    #allocation4 [shape = 's32[2]{0}', space=sflag, size = 0x8, scoped, tag = 'scoped memory for tpu_custom_call.1']
    #allocation5 [shape = 'u8[32768]{0}', space=vmem, size = 0x8000, scoped, tag = 'output window, operand 0']
    %7 = vsyncpa [#allocation3], 0
    %s8 = scalar_lea.sflag [#allocation3], 1
    %9 = vsyncpa %s8, 0
    %10 = vsyncpa [#allocation4], 0
    %s11 = scalar_lea.sflag [#allocation4], 1
    %12 = vsyncpa %s11, 0
    loop: start=0, step=1, limit=6
    $region2: #{tpu_custom_call.1} parent=1 // loop_pre_header
      _
    $region3: #{tpu_custom_call.1} parent=1 // loop_header
      %s14 = sphi 0, %s18
      %p15 = scmp.ge.s32.totalorder %s14, 6
      %s21 = sphi 0, %s40
      %s22 = sphi 0, %s36
      %s23 = sphi 0, %s32
      %s24 = sphi 0, %s21
      %s25 = sphi 0, %s22
      %s26 = sphi 0, %s23
      %s27 = sphi 0, %s24
      %s28 = sphi 0, %s25
      %s29 = sphi 0, %s26
      %s41 = sphi 0, %s41
      %s43 = sphi 0, %s41
      %s44 = sphi 0, %s43
      %s58 = sphi 0, %s44
      %s68 = sphi 0, %s70
      %s71 = sphi 0, %s68
      %s72 = sphi 0, %s71
      %s88 = sphi 0, %s72
      %s98 = sphi 0, %s100
      %s101 = sphi 0, %s98
      %s102 = sphi 0, %s101
      %s118 = sphi 0, %s102
    $region4: #{tpu_custom_call.1} parent=1 // loop_header_branch
      %17 = sbr.rel (%p15) target = $region8
    $region5: #{tpu_custom_call.1} parent=1 // loop_body
      %s19 = ssub.s32 %s14, 1
      %s20 = ssub.s32 %s14, 2
      %s30 = sadd.s32 1, %s23
      %p31 = scmp.ge.s32.totalorder %s30, 1
      %s32 = scalar_select %p31, 0, %s30
      %s33 = sadd.s32 1, %s22
      %s34 = scalar_select %p31, %s33, %s22
      %p35 = scmp.ge.s32.totalorder %s34, 2
      %s36 = scalar_select %p35, 0, %s34
      %s37 = sadd.s32 1, %s21
      %s38 = scalar_select %p35, %s37, %s21
      %p39 = scmp.ge.s32.totalorder %s38, 2
      %s40 = scalar_select %p39, 0, %s38
      %s42 = sadd.s32 %s41, 1
      %p45 = scmp.eq.s32.totalorder %s14, 3
      %p46 = scmp.ne.s32.totalorder %s41, %s43
      %p47 = scmp.eq.s32.totalorder %s14, 0
      %p48 = por %p46, %p47
      %p49 = scmp.ne.s32.totalorder %s41, %s43
      %p50 = scmp.eq.s32.totalorder %s19, 3
      %p51 = por %p49, %p50
      %p52 = scmp.ne.s32.totalorder %s43, %s44
      %p53 = scmp.eq.s32.totalorder %s19, 0
      %p54 = por %p52, %p53
      %p55 = scmp.ne.s32.totalorder %s43, %s44
      %p56 = scmp.eq.s32.totalorder %s20, 3
      %p57 = por %p55, %p56
      %p59 = scmp.ne.s32.totalorder %s44, %s58
      %p60 = scmp.eq.s32.totalorder %s20, 0
      %p61 = por %p59, %p60
      %s62 = ssub.s32 %s21, %s40
      %s63 = ssub.s32 %s22, %s36
      %s64 = sor.u32 %s62, %s63
      %s65 = ssub.s32 %s23, %s32
      %s66 = sor.u32 %s64, %s65
      %p67 = scmp.eq.s32.totalorder %s66, 0
      %s69 = sadd.s32 %s68, 1
      %s70 = scalar_select %p67, %s68, %s69
      %p73 = pneg %p67
      %p74 = scmp.eq.s32.totalorder %s14, 3
      %p75 = por %p73, %p74
      %p76 = scmp.ne.s32.totalorder %s68, %s71
      %p77 = scmp.eq.s32.totalorder %s14, 0
      %p78 = por %p76, %p77
      %p79 = scmp.ne.s32.totalorder %s68, %s71
      %p80 = scmp.eq.s32.totalorder %s19, 3
      %p81 = por %p79, %p80
      %p82 = scmp.ne.s32.totalorder %s71, %s72
      %p83 = scmp.eq.s32.totalorder %s19, 0
      %p84 = por %p82, %p83
      %p85 = scmp.ne.s32.totalorder %s71, %s72
      %p86 = scmp.eq.s32.totalorder %s20, 3
      %p87 = por %p85, %p86
      %p89 = scmp.ne.s32.totalorder %s72, %s88
      %p90 = scmp.eq.s32.totalorder %s20, 0
      %p91 = por %p89, %p90
      %s92 = ssub.s32 %s21, %s40
      %s93 = ssub.s32 %s23, %s32
      %s94 = sor.u32 %s92, %s93
      %s95 = ssub.s32 %s22, %s36
      %s96 = sor.u32 %s94, %s95
      %p97 = scmp.eq.s32.totalorder %s96, 0
      %s99 = sadd.s32 %s98, 1
      %s100 = scalar_select %p97, %s98, %s99
      %p103 = pneg %p97
      %p104 = scmp.eq.s32.totalorder %s14, 3
      %p105 = por %p103, %p104
      %p106 = scmp.ne.s32.totalorder %s98, %s101
      %p107 = scmp.eq.s32.totalorder %s14, 0
      %p108 = por %p106, %p107
      %p109 = scmp.ne.s32.totalorder %s98, %s101
      %p110 = scmp.eq.s32.totalorder %s19, 3
      %p111 = por %p109, %p110
      %p112 = scmp.ne.s32.totalorder %s101, %s102
      %p113 = scmp.eq.s32.totalorder %s19, 0
      %p114 = por %p112, %p113
      %p115 = scmp.ne.s32.totalorder %s101, %s102
      %p116 = scmp.eq.s32.totalorder %s20, 3
      %p117 = por %p115, %p116
      %p119 = scmp.ne.s32.totalorder %s102, %s118
      %p120 = scmp.eq.s32.totalorder %s20, 0
      %p121 = por %p119, %p120
      %p122 = scmp.le.s32.totalorder 1, %s14
      %p123 = scmp.lt.s32.totalorder %s14, 5
      %p124 = pnand %p122, %p123
      %p125 = pneg %p124
      // Predicated region
      $region9: #{tpu_custom_call.1} parent=5 // pred_check
        _
      $region10: #{tpu_custom_call.1} parent=5 // pred_check_branch
        %127 = sbr.rel (%p124) target = $region12
      $region11: #{tpu_custom_call.1} parent=5 // pred_region
        %s128 = ssub.s32 %s14, 1
        // Predicated region
        $region13: #{tpu_custom_call.1} parent=11 // pred_check
          %p129 = pneg %p54
        $region14: #{tpu_custom_call.1} parent=11 // pred_check_branch
          %131 = sbr.rel (%p129) target = $region16
        $region15: #{tpu_custom_call.1} parent=11 // pred_region
          _
        $region16: #{tpu_custom_call.1} parent=11 // pred_fallthru
          _
      $region12: #{tpu_custom_call.1} parent=5 // pred_fallthru
        _
      %p132 = scmp.lt.s32.totalorder %s14, 4
      // Predicated region
      $region17: #{tpu_custom_call.1} parent=5 // pred_check
        %p133 = pneg %p132
      $region18: #{tpu_custom_call.1} parent=5 // pred_check_branch
        %135 = sbr.rel (%p133) target = $region20
      $region19: #{tpu_custom_call.1} parent=5 // pred_region
        // Predicated region
        $region21: #{tpu_custom_call.1} parent=19 // pred_check
          %p136 = pneg %p78
        $region22: #{tpu_custom_call.1} parent=19 // pred_check_branch
          %138 = sbr.rel (%p136) target = $region24
        $region23: #{tpu_custom_call.1} parent=19 // pred_region
          %s139 = sand.u32 %s68, 1
          %s140 = scalar_lea.sflag [#allocation3], %s139
          %s141 = sand.u32 %s68, 1
          %s142 = smul.addr %s141, 32
          %s143 = scalar_lea.vmem [#allocation2], %s142
          %s144 = smul.u32 2, %s23
          %s146 = ssub.s32 512, 512
          %147 = vsyncadd %s140, %s146
          %s148 = smul.addr %s144, 2
          %s149 = smul.addr %s22, 4
          %s150 = sadd.s32 %s148, %s149
          %s151 = smul.addr %s21, 8
          %s152 = sadd.s32 %s150, %s151
          %s153 = smul.addr %s152, 128
          %s154 = scalar_lea.hbm %s1, %s153
          %s155 = sshll.u32 %s143, 4
          %s156 = int_to_ptr.vmem [resolvable:$true] %s155
          %161 = dma.hbm_to_vmem [thread:$0]  %s154, 512, %s156, %s140, 256, 256, 16
        $region24: #{tpu_custom_call.1} parent=19 // pred_fallthru
          _
      $region20: #{tpu_custom_call.1} parent=5 // pred_fallthru
        _
      %p162 = scmp.le.s32.totalorder 1, %s14
      %p163 = scmp.lt.s32.totalorder %s14, 5
      %p164 = pnand %p162, %p163
      %p165 = pneg %p164
      // Predicated region
      $region25: #{tpu_custom_call.1} parent=5 // pred_check
        _
      $region26: #{tpu_custom_call.1} parent=5 // pred_check_branch
        %167 = sbr.rel (%p164) target = $region28
      $region27: #{tpu_custom_call.1} parent=5 // pred_region
        %s168 = ssub.s32 %s14, 1
        %s169 = sand.u32 %s71, 1
        %s170 = scalar_lea.sflag [#allocation3], %s169
        %s171 = sand.u32 %s71, 1
        %s172 = smul.addr %s171, 32
        %s173 = scalar_lea.vmem [#allocation2], %s172
        // Predicated region
        $region29: #{tpu_custom_call.1} parent=27 // pred_check
          %p174 = pneg %p84
        $region30: #{tpu_custom_call.1} parent=27 // pred_check_branch
          %176 = sbr.rel (%p174) target = $region32
        $region31: #{tpu_custom_call.1} parent=27 // pred_region
          %177 = dma.done %s170, 512
        $region32: #{tpu_custom_call.1} parent=27 // pred_fallthru
          _
        %p178 = pneg %p54
        %p179 = pneg %p51
        %s180 = sand.u32 %s71, 1
        %s181 = scalar_lea.sflag [#allocation3], %s180
        %s182 = sand.u32 %s71, 1
        %s183 = smul.addr %s182, 32
        %s184 = scalar_lea.vmem [#allocation2], %s183
        %p185 = pneg %p84
        %p186 = pneg %p81
        %p187 = pneg %p114
        %p188 = pneg %p111
        %s189 = sand.u32 %s101, 1
        %s190 = scalar_lea.sflag [#allocation4], %s189
        %s191 = sand.u32 %s101, 1
        %s192 = smul.addr %s191, 32
        %s193 = scalar_lea.vmem [#allocation5], %s192
        %s194 = smul.u32 2, %s26
        %s195 = smul.u32 2, %s26
        %s196 = smul.u32 2, %s25
        %s197 = smul.u32 %s25, 16
        %s198 = smul.u32 %s26, 16
        %s199 = sadd.s32 %s197, %s198
        %s200 = scalar_lea.vmem %s0, %s199
        %v201 = vld [vmem:[%s200] sm:$0xff]
        %v202 = vld [vmem:[%s200 + $0x8] sm:$0xff]
        %v203 = vld [vmem:[%s173] sm:$0xff]
        %v204 = vld [vmem:[%s173 + $0x8] sm:$0xff]
        %v205 = vld [vmem:[%s173 + $0x10] sm:$0xff]
        %v206 = vld [vmem:[%s173 + $0x18] sm:$0xff]
        %v207 = vadd.f32 %v203, %v204
        %208 = vadd.xlane.f32.xlu0 %v207
        %v209 = vpop.xlane.xlu0 %208
        %v210 = vadd.f32 %v205, %v206
        %211 = vadd.xlane.f32.xlu0 %v210
        %v212 = vpop.xlane.xlu0 %211
        %v213 = vrcp.pop 256.0
        %v214 = vmul.f32 %v209, %v213
        %v215 = vmul.f32 %v212, %v213
        %v216 = vsub.f32 %v203, %v214
        %v217 = vsub.f32 %v204, %v214
        %v218 = vsub.f32 %v205, %v215
        %v219 = vsub.f32 %v206, %v215
        %v220 = vmul.f32 %v216, %v216
        %v221 = vmul.f32 %v217, %v217
        %v222 = vmul.f32 %v218, %v218
        %v223 = vmul.f32 %v219, %v219
        %v224 = vadd.f32 %v220, %v221
        %225 = vadd.xlane.f32.xlu0 %v224
        %v226 = vpop.xlane.xlu0 %225
        %v227 = vadd.f32 %v222, %v223
        %228 = vadd.xlane.f32.xlu0 %v227
        %v229 = vpop.xlane.xlu0 %228
        %v230 = vmul.f32 %v226, %v213
        %v231 = vmul.f32 %v229, %v213
        %v232 = vadd.f32 %v230, 1e-05
        %v233 = vadd.f32 %v231, 1e-05
        %v234 = vrsqrt.pop %v232
        %v235 = vrsqrt.pop %v233
        %v236 = vmul.f32 %v201, %v234
        %v237 = vmul.f32 %v202, %v235
        %v238 = vmul.f32 %v201, %v214
        %v239 = vmul.f32 %v202, %v215
        %242 = vrot.lane.b32.xlu0 %v238, 127
        %v243 = vpop.permute.xlu0 %242
        %244 = vrot.lane.b32.xlu0 %v239, 127
        %v245 = vpop.permute.xlu0 %244
        %v248 = vadd.f32 %v201, %v243
        %v249 = vadd.f32 %v202, %v245
        %v250 = vmul.f32 %v236, %v214
        %v251 = vmul.f32 %v237, %v215
        %254 = vrot.lane.b32.xlu0 %v250, 1
        %v255 = vpop.permute.xlu0 %254
        %256 = vrot.lane.b32.xlu0 %v251, 1
        %v257 = vpop.permute.xlu0 %256
        %v260 = vsub.f32 %v248, %v255
        %v261 = vsub.f32 %v249, %v257
        %263 = vset.pattern.permute.xlu0 0
        %264 = vperm.xlu0 %263, %v236
        %v265 = vpop.permute.xlu0 %264
        %268 = vset.pattern.permute.xlu0 0
        %269 = vperm.xlu0 %268, %v237
        %v270 = vpop.permute.xlu0 %269
        %v272 = vmul.f32 %v265, %v203
        %v273 = vmul.f32 %v265, %v204
        %v274 = vmul.f32 %v270, %v205
        %v275 = vmul.f32 %v270, %v206
        %277 = vset.pattern.permute.xlu0 1
        %278 = vperm.xlu0 %277, %v260
        %v279 = vpop.permute.xlu0 %278
        %282 = vset.pattern.permute.xlu0 1
        %283 = vperm.xlu0 %282, %v261
        %v284 = vpop.permute.xlu0 %283
        %v286 = vadd.f32 %v272, %v279
        %v287 = vadd.f32 %v273, %v279
        %v288 = vadd.f32 %v274, %v284
        %v289 = vadd.f32 %v275, %v284
        %v290 = vxor.u32 %v286, 2147483648
        %v291 = vxor.u32 %v287, 2147483648
        %v292 = vxor.u32 %v288, 2147483648
        %v293 = vxor.u32 %v289, 2147483648
        %v294 = vmul.f32 %v290, 1.442695
        %v295 = vpow.pop %v294
        %v296 = vmul.f32 %v291, 1.442695
        %v297 = vpow.pop %v296
        %v298 = vmul.f32 %v292, 1.442695
        %v299 = vpow.pop %v298
        %v300 = vmul.f32 %v293, 1.442695
        %v301 = vpow.pop %v300
        %v302 = vadd.f32 %v295, 1.0
        %v303 = vadd.f32 %v297, 1.0
        %v304 = vadd.f32 %v299, 1.0
        %v305 = vadd.f32 %v301, 1.0
        %v306 = vrcp.pop %v302
        %v307 = vmul.f32 1.0, %v306
        %v308 = vrcp.pop %v303
        %v309 = vmul.f32 1.0, %v308
        %v310 = vrcp.pop %v304
        %v311 = vmul.f32 1.0, %v310
        %v312 = vrcp.pop %v305
        %v313 = vmul.f32 1.0, %v312
        %v314 = vmul.f32 %v203, %v307
        %v315 = vmul.f32 %v204, %v309
        %v316 = vmul.f32 %v205, %v311
        %v317 = vmul.f32 %v206, %v313
        %318 = vst [vmem:[%s193] sm:$0xff] %v314
        %319 = vst [vmem:[%s193 + $0x8] sm:$0xff] %v315
        %320 = vst [vmem:[%s193 + $0x10] sm:$0xff] %v316
        %321 = vst [vmem:[%s193 + $0x18] sm:$0xff] %v317
        %s322 = sand.u32 %s101, 1
        %s323 = scalar_lea.sflag [#allocation4], %s322
        %s324 = sand.u32 %s101, 1
        %s325 = smul.addr %s324, 32
        %s326 = scalar_lea.vmem [#allocation5], %s325
        // Predicated region
        $region33: #{tpu_custom_call.1} parent=27 // pred_check
          %p327 = pneg %p111
        $region34: #{tpu_custom_call.1} parent=27 // pred_check_branch
          %329 = sbr.rel (%p327) target = $region36
        $region35: #{tpu_custom_call.1} parent=27 // pred_region
          %s330 = smul.u32 2, %s26
          %s331 = smul.u32 2, %s25
          %s333 = ssub.s32 512, 512
          %334 = vsyncadd %s323, %s333
          %s335 = smul.addr %s330, 4
          %s336 = sadd.s32 %s331, %s335
          %s337 = smul.addr %s24, 8
          %s338 = sadd.s32 %s336, %s337
          %s339 = smul.addr %s338, 128
          %s340 = scalar_lea.hbm %s2, %s339
          %s341 = sshll.u32 %s326, 4
          %s342 = int_to_ptr.vmem [resolvable:$true] %s341
          %347 = dma.vmem_to_hbm [thread:$0]  %s342, 512, %s340, %s323, 256, 512, 16
        $region36: #{tpu_custom_call.1} parent=27 // pred_fallthru
          _
      $region28: #{tpu_custom_call.1} parent=5 // pred_fallthru
        _
      %p348 = scmp.le.s32.totalorder 2, %s14
      // Predicated region
      $region37: #{tpu_custom_call.1} parent=5 // pred_check
        %p349 = pneg %p348
      $region38: #{tpu_custom_call.1} parent=5 // pred_check_branch
        %351 = sbr.rel (%p349) target = $region40
      $region39: #{tpu_custom_call.1} parent=5 // pred_region
        %s352 = ssub.s32 %s14, 2
        // Predicated region
        $region41: #{tpu_custom_call.1} parent=39 // pred_check
          %p353 = pneg %p117
        $region42: #{tpu_custom_call.1} parent=39 // pred_check_branch
          %355 = sbr.rel (%p353) target = $region44
        $region43: #{tpu_custom_call.1} parent=39 // pred_region
          %s356 = sand.u32 %s102, 1
          %s357 = scalar_lea.sflag [#allocation4], %s356
          %s358 = sand.u32 %s102, 1
          %s359 = smul.addr %s358, 32
          %s360 = scalar_lea.vmem [#allocation5], %s359
          %361 = dma.done %s357, 512
        $region44: #{tpu_custom_call.1} parent=39 // pred_fallthru
          _
      $region40: #{tpu_custom_call.1} parent=5 // pred_fallthru
        _
    $region6: #{tpu_custom_call.1} parent=1 // loop_footer
      %s18 = sadd.s32 1, %s14
    $region7: #{tpu_custom_call.1} parent=1 // loop_footer_branch
      %13 = sbr.rel target = $region3
    $region8: #{tpu_custom_call.1} parent=1 // loop_exit
      _
    %362 = vsyncpa [#allocation3], 1
    %s363 = scalar_lea.sflag [#allocation3], 1
    %364 = vsyncpa %s363, 1
    %365 = vsyncpa [#allocation4], 1
    %s366 = scalar_lea.sflag [#allocation4], 1
    %367 = vsyncpa %s366, 1

</llo_original>
